<compile_context>
chip_gen: v5e
topology: v5e:2x2
jax: 0.10.0
libtpu: 0.0.40
codegen_flags: <defaults>
</compile_context>

<pallas_src>
import jax
import jax.numpy as jnp
from jax.experimental import pallas as pl
from jax.experimental.pallas import tpu as pltpu


def _wave1_kernel(x_ref, weff_ref, b1_ref, w2_ref, b2_ref, w3_ref, b3_ref, out_ref):
    """One batch tile: fused (DWT+pool+Linear1), ReLU, Linear2, ReLU, Linear3.

    x_ref    : (TN, H*W)   raw pixels, native dtype (lane-dense last dim)
    weff_ref : (H*W, 150)  first Linear with the linear wavelet+pool folded in
    b1/b2/b3 : (1, 150)/(1, 50)/(1, 2)  f32 biases
    w2/w3    : (150, 50)/(50, 2)        compute-dtype weights
    out_ref  : (TN, 2) f32
    """
    cd = weff_ref.dtype                                  # MXU input dtype (bf16 or f32)
    x = x_ref[...].astype(cd)
    h1 = jnp.dot(x, weff_ref[...], preferred_element_type=jnp.float32)
    h1 = jnp.maximum(h1 + b1_ref[...], 0.0)              # Linear(144,150)+ReLU (f32)
    h2 = jnp.dot(h1.astype(cd), w2_ref[...], preferred_element_type=jnp.float32)
    h2 = jnp.maximum(h2 + b2_ref[...], 0.0)              # Linear(150,50)+ReLU (f32)
    out = jnp.dot(h2.astype(cd), w3_ref[...], preferred_element_type=jnp.float32)
    out_ref[...] = (out + b3_ref[...]).astype(out_ref.dtype)   # Linear(50,2)


def _fold_frontend_into_w1(h, w, w1):
    """Fold Haar DWT + AdaptiveAvgPool2d((6,6)) + flatten into w1.

    Returns W_eff of shape (H*W, hidden) s.t. feats @ w1 == x_flat @ W_eff.
    """
    hh, wh = h // 2, w // 2
    kh, kw = hh // 6, wh // 6
    r = jnp.arange(h)
    s = jnp.arange(w)
    row_sign = (1 - 2 * (r % 2)).astype(jnp.float32)              # +1 even row, -1 odd
    col_sign = (1 - 2 * (s % 2)).astype(jnp.float32)
    ones = jnp.ones((h, w), jnp.float32)
    # Haar signs per pixel for [LL, LH, HL, HH]  (1/2 normalization applied in scale)
    sgn = jnp.stack([ones,
                     ones * col_sign[None, :],
                     ones * row_sign[:, None],
                     row_sign[:, None] * col_sign[None, :]], axis=0)   # (4, H, W)
    # 6x6 pooling cell index for each pixel (cell of its half-res coordinate).
    cell = ((r // 2) // kh)[:, None] * 6 + ((s // 2) // kw)[None, :]   # (H, W) in [0,36)
    cell_oh = jax.nn.one_hot(cell, 36, dtype=jnp.float32)              # (H, W, 36)
    scale = 0.5 / (kh * kw)                                            # DWT 1/2 * pool mean
    a = scale * sgn[:, :, :, None] * cell_oh[None, :, :, :]            # (4, H, W, 36)
    a = a.transpose(0, 3, 1, 2).reshape(4 * 36, h * w)                 # (144, H*W)
    return a.T @ w1                                                    # (H*W, hidden)


def wave1_prepare(params, h, w, *, compute_dtype=jnp.bfloat16):
    """One-time host-side prep: fold the linear front-end into w1 and cast weights.

    Call once per parameter set and reuse the result across forward calls so the
    fold / reshapes / casts are not re-executed on every forward pass.
    """
    w1, b1, w2, b2, w3, b3 = params
    assert h % 2 == 0 and w % 2 == 0
    hh, wh = h // 2, w // 2
    # TODO(synk): AdaptiveAvgPool2d((6,6)) only implemented for the evenly
    # divisible case (matches PyTorch there); non-divisible needs variable windows.
    assert hh % 6 == 0 and wh % 6 == 0

    w_eff = _fold_frontend_into_w1(h, w, jnp.asarray(w1, jnp.float32))
    return (
        w_eff.astype(compute_dtype),                           # (H*W, 150)
        jnp.asarray(b1, jnp.float32).reshape(1, -1),           # (1, 150)
        jnp.asarray(w2, compute_dtype),                        # (150, 50)
        jnp.asarray(b2, jnp.float32).reshape(1, -1),           # (1, 50)
        jnp.asarray(w3, compute_dtype),                        # (50, 2)
        jnp.asarray(b3, jnp.float32).reshape(1, -1),           # (1, 2)
    )


def _round_up(x, m):
    return ((x + m - 1) // m) * m


def wave1_forward(x, prepared, *, tn_max=2048):
    """x: (N, 1, H, W).  prepared = wave1_prepare(params, H, W, ...)."""
    w_eff, b1, w2, b2, w3, b3 = prepared
    n, c_in, h, w = x.shape
    hw = h * w
    assert c_in == 1 and w_eff.shape[0] == hw

    # Keep x in its native dtype: no extra HBM upcast pass; the kernel casts the
    # tile to the compute dtype in vregs.
    x_flat = x.reshape(n, hw)
    n_out = w3.shape[1]

    # Sublane granularity for the tiled input block (f32: 8, bf16: 16, int8: 32).
    sub = {4: 8, 2: 16, 1: 32}.get(jnp.dtype(x_flat.dtype).itemsize, 8)

    # Batch tiling: biggest tile that amortizes per-step overhead, capped so that
    # small batches still produce >=2 grid steps (both TensorCores on v7x).
    if n >= 2 * tn_max:
        tn = tn_max
    else:
        tn = min(tn_max, _round_up(max(pl.cdiv(n, 2), 1), sub))
    num_tiles = pl.cdiv(n, tn)        # partial trailing block: no pad-to-tile copy

    def _const_spec(shape):
        # Constant block index -> weight stays resident in VMEM across grid steps.
        return pl.BlockSpec(shape, lambda i: (0, 0))

    d1 = w_eff.shape[1]
    d2 = w2.shape[1]
    flops = 2 * n * (hw * d1 + d1 * d2 + d2 * n_out)
    bytes_accessed = (
        int(x_flat.size) * jnp.dtype(x_flat.dtype).itemsize
        + n * n_out * 4
        + sum(int(a.size) * jnp.dtype(a.dtype).itemsize
              for a in (w_eff, b1, w2, b2, w3, b3)))

    out = pl.pallas_call(
        _wave1_kernel,
        out_shape=jax.ShapeDtypeStruct((n, n_out), jnp.float32),
        grid=(num_tiles,),
        in_specs=[
            pl.BlockSpec((tn, hw), lambda i: (i, 0)),      # x: tiled over batch
            _const_spec(w_eff.shape),
            _const_spec(b1.shape),
            _const_spec(w2.shape),
            _const_spec(b2.shape),
            _const_spec(w3.shape),
            _const_spec(b3.shape),
        ],
        out_specs=pl.BlockSpec((tn, n_out), lambda i: (i, 0)),
        compiler_params=pltpu.CompilerParams(
            dimension_semantics=("parallel",),             # shard batch across TCs (v7x)
            vmem_limit_bytes=32 * 1024 * 1024),
        cost_estimate=pl.CostEstimate(
            flops=int(flops), transcendentals=0, bytes_accessed=int(bytes_accessed)),
    )(x_flat, w_eff, b1, w2, b2, w3, b3)
    return out


def wave1_reference(x, params):
    """Plain-JAX reference mirroring the PyTorch forward (eval mode)."""
    w1, b1, w2, b2, w3, b3 = params
    n = x.shape[0]
    a = x[:, 0, 0::2, 0::2]
    b = x[:, 0, 0::2, 1::2]
    c = x[:, 0, 1::2, 0::2]
    d = x[:, 0, 1::2, 1::2]
    ll = 0.5 * (a + b + c + d)
    lh = 0.5 * (a - b + c - d)
    hl = 0.5 * (a + b - c - d)
    hh = 0.5 * (a - b - c + d)
    sub = jnp.stack([ll, lh, hl, hh], axis=1)                     # (N,4,H/2,W/2)
    hh_, wh_ = sub.shape[2], sub.shape[3]
    kh, kw = hh_ // 6, wh_ // 6
    pooled = sub.reshape(n, 4, 6, kh, 6, kw).mean(axis=(3, 5))    # AdaptiveAvgPool2d((6,6))
    feats = pooled.reshape(n, 4 * 6 * 6)
    h1 = jnp.maximum(feats @ w1 + b1.reshape(1, -1), 0.0)
    h2 = jnp.maximum(h1 @ w2 + b2.reshape(1, -1), 0.0)
    return h2 @ w3 + b3.reshape(1, -1)


if __name__ == "__main__":
    key = jax.random.PRNGKey(0)
    kx, k1, k2, k3, k4, k5, k6 = jax.random.split(key, 7)

    N, H, W = 2, 24, 24                      # -> DWT (2,4,12,12) -> pool (2,4,6,6)
    x = jax.random.normal(kx, (N, 1, H, W), jnp.float32)

    # Deterministic synthetic parameters (shapes from the nn.Linear layers).
    w1 = jax.random.normal(k1, (4 * 6 * 6, 150), jnp.float32) * 0.05
    b1 = jax.random.normal(k2, (1, 150), jnp.float32) * 0.05
    w2 = jax.random.normal(k3, (150, 50), jnp.float32) * 0.05
    b2 = jax.random.normal(k4, (1, 50), jnp.float32) * 0.05
    w3 = jax.random.normal(k5, (50, 2), jnp.float32) * 0.05
    b3 = jax.random.normal(k6, (1, 2), jnp.float32) * 0.05
    params = (w1, b1, w2, b2, w3, b3)

    ref = wave1_reference(x, params)

    # f32 MXU path: exact check against the plain-JAX reference.
    prep_f32 = wave1_prepare(params, H, W, compute_dtype=jnp.float32)
    out_f32 = wave1_forward(x, prep_f32)
    jax.block_until_ready(out_f32)
    assert out_f32.shape == (N, 2)
    assert jnp.allclose(out_f32, ref, rtol=1e-4, atol=1e-4), (out_f32, ref)

    # bf16 MXU path (default / fast): looser tolerance (bf16 inputs, f32 accum).
    prep_bf16 = wave1_prepare(params, H, W)
    out_bf16 = wave1_forward(x, prep_bf16)
    jax.block_until_ready(out_bf16)
    assert out_bf16.shape == (N, 2)
    assert jnp.allclose(out_bf16, ref, rtol=5e-2, atol=1e-2), (out_bf16, ref)

    # Odd batch: exercises multi-step grid + partial trailing block (no pad copy).
    N2 = 37
    x2 = jax.random.normal(kx, (N2, 1, H, W), jnp.float32)
    ref2 = wave1_reference(x2, params)
    out2 = wave1_forward(x2, prep_bf16)
    jax.block_until_ready(out2)
    assert out2.shape == (N2, 2)
    assert jnp.allclose(out2, ref2, rtol=5e-2, atol=1e-2), (out2, ref2)

    print("KERNEL_OK")
</pallas_src>

<mosaic_0001>
module attributes {stable_mosaic.version = 11 : i64} {
  func.func @_wave1_kernel(%arg0: i32, %arg1: memref<8x576xf32, #tpu.memory_space<vmem>>, %arg2: memref<576x150xf32, #tpu.memory_space<vmem>>, %arg3: memref<1x150xf32, #tpu.memory_space<vmem>>, %arg4: memref<150x50xf32, #tpu.memory_space<vmem>>, %arg5: memref<1x50xf32, #tpu.memory_space<vmem>>, %arg6: memref<50x2xf32, #tpu.memory_space<vmem>>, %arg7: memref<1x2xf32, #tpu.memory_space<vmem>>, %arg8: memref<8x2xf32, #tpu.memory_space<vmem>>) attributes {dimension_semantics = [#tpu.dimension_semantics<parallel>], iteration_bounds = array<i64: 1>, scalar_prefetch = 0 : i64, scratch_operands = 0 : i64, tpu.core_type = #tpu.core_type<tc>, window_params = [{transform_indices = @transform_0, window_bounds = array<i64: 8, 576>}, {pipeline_mode = #tpu.pipeline_mode<synchronous>, transform_indices = @transform_1, window_bounds = array<i64: 576, 150>}, {pipeline_mode = #tpu.pipeline_mode<synchronous>, transform_indices = @transform_2, window_bounds = array<i64: 1, 150>}, {pipeline_mode = #tpu.pipeline_mode<synchronous>, transform_indices = @transform_3, window_bounds = array<i64: 150, 50>}, {pipeline_mode = #tpu.pipeline_mode<synchronous>, transform_indices = @transform_4, window_bounds = array<i64: 1, 50>}, {pipeline_mode = #tpu.pipeline_mode<synchronous>, transform_indices = @transform_5, window_bounds = array<i64: 50, 2>}, {pipeline_mode = #tpu.pipeline_mode<synchronous>, transform_indices = @transform_6, window_bounds = array<i64: 1, 2>}, {transform_indices = @transform_7, window_bounds = array<i64: 8, 2>}]} {
    %c0 = arith.constant 0 : index
    %c0_0 = arith.constant 0 : index
    %0 = vector.load %arg1[%c0, %c0_0] : memref<8x576xf32, #tpu.memory_space<vmem>>, vector<8x576xf32>
    %c0_1 = arith.constant 0 : index
    %c0_2 = arith.constant 0 : index
    %1 = vector.load %arg2[%c0_1, %c0_2] : memref<576x150xf32, #tpu.memory_space<vmem>>, vector<576x150xf32>
    %cst = arith.constant dense<0.000000e+00> : vector<8x150xf32>
    %2 = tpu.matmul %0, %1, %cst {dimension_numbers = #tpu.dot_dimension_numbers<[1], [0], [0], [1], [0, 0, 1, 1], [], []>} : vector<8x576xf32>, vector<576x150xf32>, vector<8x150xf32> -> vector<8x150xf32>
    %c0_3 = arith.constant 0 : index
    %c0_4 = arith.constant 0 : index
    %3 = vector.load %arg3[%c0_3, %c0_4] : memref<1x150xf32, #tpu.memory_space<vmem>>, vector<1x150xf32>
    %4 = vector.broadcast %3 : vector<1x150xf32> to vector<8x150xf32>
    %5 = arith.addf %2, %4 : vector<8x150xf32>
    %cst_5 = arith.constant 0.000000e+00 : f32
    %6 = vector.broadcast %cst_5 : f32 to vector<8x150xf32>
    %7 = arith.maximumf %5, %6 : vector<8x150xf32>
    %c0_6 = arith.constant 0 : index
    %c0_7 = arith.constant 0 : index
    %8 = vector.load %arg4[%c0_6, %c0_7] : memref<150x50xf32, #tpu.memory_space<vmem>>, vector<150x50xf32>
    %cst_8 = arith.constant dense<0.000000e+00> : vector<8x50xf32>
    %9 = tpu.matmul %7, %8, %cst_8 {dimension_numbers = #tpu.dot_dimension_numbers<[1], [0], [0], [1], [0, 0, 1, 1], [], []>} : vector<8x150xf32>, vector<150x50xf32>, vector<8x50xf32> -> vector<8x50xf32>
    %c0_9 = arith.constant 0 : index
    %c0_10 = arith.constant 0 : index
    %10 = vector.load %arg5[%c0_9, %c0_10] : memref<1x50xf32, #tpu.memory_space<vmem>>, vector<1x50xf32>
    %11 = vector.broadcast %10 : vector<1x50xf32> to vector<8x50xf32>
    %12 = arith.addf %9, %11 : vector<8x50xf32>
    %cst_11 = arith.constant 0.000000e+00 : f32
    %13 = vector.broadcast %cst_11 : f32 to vector<8x50xf32>
    %14 = arith.maximumf %12, %13 : vector<8x50xf32>
    %c0_12 = arith.constant 0 : index
    %c0_13 = arith.constant 0 : index
    %15 = vector.load %arg6[%c0_12, %c0_13] : memref<50x2xf32, #tpu.memory_space<vmem>>, vector<50x2xf32>
    %cst_14 = arith.constant dense<0.000000e+00> : vector<8x2xf32>
    %16 = tpu.matmul %14, %15, %cst_14 {dimension_numbers = #tpu.dot_dimension_numbers<[1], [0], [0], [1], [0, 0, 1, 1], [], []>} : vector<8x50xf32>, vector<50x2xf32>, vector<8x2xf32> -> vector<8x2xf32>
    %c0_15 = arith.constant 0 : index
    %c0_16 = arith.constant 0 : index
    %17 = vector.load %arg7[%c0_15, %c0_16] : memref<1x2xf32, #tpu.memory_space<vmem>>, vector<1x2xf32>
    %18 = vector.broadcast %17 : vector<1x2xf32> to vector<8x2xf32>
    %19 = arith.addf %16, %18 : vector<8x2xf32>
    %c0_17 = arith.constant 0 : index
    %c0_18 = arith.constant 0 : index
    %20 = vector.load %arg8[%c0_17, %c0_18] : memref<8x2xf32, #tpu.memory_space<vmem>>, vector<8x2xf32>
    tpu.vector_store %arg8[%c0_17, %c0_18], %19 {strides = array<i32>} : memref<8x2xf32, #tpu.memory_space<vmem>>, vector<8x2xf32>,
    return
  }
  func.func @transform_0(%arg0: i32) -> (i32, i32) {
    %c0_i32 = arith.constant 0 : i32
    %c0_i32_0 = arith.constant 0 : i32
    return %arg0, %c0_i32 : i32, i32
  }
  func.func @transform_1(%arg0: i32) -> (i32, i32) {
    %c0_i32 = arith.constant 0 : i32
    %c0_i32_0 = arith.constant 0 : i32
    %c0_i32_1 = arith.constant 0 : i32
    return %c0_i32, %c0_i32_0 : i32, i32
  }
  func.func @transform_2(%arg0: i32) -> (i32, i32) {
    %c0_i32 = arith.constant 0 : i32
    %c0_i32_0 = arith.constant 0 : i32
    %c0_i32_1 = arith.constant 0 : i32
    return %c0_i32, %c0_i32_0 : i32, i32
  }
  func.func @transform_3(%arg0: i32) -> (i32, i32) {
    %c0_i32 = arith.constant 0 : i32
    %c0_i32_0 = arith.constant 0 : i32
    %c0_i32_1 = arith.constant 0 : i32
    return %c0_i32, %c0_i32_0 : i32, i32
  }
  func.func @transform_4(%arg0: i32) -> (i32, i32) {
    %c0_i32 = arith.constant 0 : i32
    %c0_i32_0 = arith.constant 0 : i32
    %c0_i32_1 = arith.constant 0 : i32
    return %c0_i32, %c0_i32_0 : i32, i32
  }
  func.func @transform_5(%arg0: i32) -> (i32, i32) {
    %c0_i32 = arith.constant 0 : i32
    %c0_i32_0 = arith.constant 0 : i32
    %c0_i32_1 = arith.constant 0 : i32
    return %c0_i32, %c0_i32_0 : i32, i32
  }
  func.func @transform_6(%arg0: i32) -> (i32, i32) {
    %c0_i32 = arith.constant 0 : i32
    %c0_i32_0 = arith.constant 0 : i32
    %c0_i32_1 = arith.constant 0 : i32
    return %c0_i32, %c0_i32_0 : i32, i32
  }
  func.func @transform_7(%arg0: i32) -> (i32, i32) {
    %c0_i32 = arith.constant 0 : i32
    %c0_i32_0 = arith.constant 0 : i32
    return %arg0, %c0_i32 : i32, i32
  }
}

</mosaic_0001>

<llo_original>
// kernel: tpu_custom_call.1
$region0: #{tpu_custom_call.1}
  #allocation0 [shape = 'u32[]', space=smem, size = 0x4, offset = 0x4, fixed_abs, tag = 'smem constant byte address 0x4 - core index']
  #allocation1 [shape = 'u32[72,128]{1,0:T(1,128)}', space=vmem, size = 0x9000, scoped, tag = 'internal scratch']
  %s0 = inlined_call_operand.vmem [shape: f32[2,576], index: 0, kind: input, shape index: {}]
  %s1 = inlined_call_operand.vmem [shape: f32[576,150], index: 1, kind: input, shape index: {}]
  %s2 = inlined_call_operand.vmem [shape: f32[1,150], index: 2, kind: input, shape index: {}]
  %s3 = inlined_call_operand.vmem [shape: f32[150,50], index: 3, kind: input, shape index: {}]
  %s4 = inlined_call_operand.vmem [shape: f32[1,50], index: 4, kind: input, shape index: {}]
  %s5 = inlined_call_operand.vmem [shape: f32[50,2], index: 5, kind: input, shape index: {}]
  %s6 = inlined_call_operand.vmem [shape: f32[1,2], index: 6, kind: input, shape index: {}]
  %s7 = inlined_call_operand.hbm [shape: f32[2,2], index: 7, kind: output, shape index: {}]
  %s8 = sld [smem:[#allocation0]]
  $region38: #{tpu_custom_call.1} parent=0
    _
  %s10 = ssub.s32 1, %s8
  %s11 = scalar_select 0, %s10, %s8
  $region1: #{tpu_custom_call.1} parent=0
    #allocation2 [shape = 'u8[4096]{0}', space=vmem, size = 0x1000, scoped, tag = 'output window, operand 0, single buffered']
    #allocation3 [shape = 's32[1]{0}', space=sflag, size = 0x4, scoped, tag = 'scoped memory for tpu_custom_call.1']
    %12 = vsyncpa [#allocation3], 0
    // Predicated region
    $region2: #{tpu_custom_call.1} parent=1 // pred_check
      _
    $region3: #{tpu_custom_call.1} parent=1 // pred_check_branch
      %14 = sbr.rel (0) target = $region5
    $region4: #{tpu_custom_call.1} parent=1 // pred_region
      _
    $region5: #{tpu_custom_call.1} parent=1 // pred_fallthru
      _
    // Predicated region
    $region6: #{tpu_custom_call.1} parent=1 // pred_check
      _
    $region7: #{tpu_custom_call.1} parent=1 // pred_check_branch
      %16 = sbr.rel (0) target = $region9
    $region8: #{tpu_custom_call.1} parent=1 // pred_region
      _
    $region9: #{tpu_custom_call.1} parent=1 // pred_fallthru
      _
    // Predicated region
    $region10: #{tpu_custom_call.1} parent=1 // pred_check
      _
    $region11: #{tpu_custom_call.1} parent=1 // pred_check_branch
      %18 = sbr.rel (0) target = $region13
    $region12: #{tpu_custom_call.1} parent=1 // pred_region
      _
    $region13: #{tpu_custom_call.1} parent=1 // pred_fallthru
      _
    // Predicated region
    $region14: #{tpu_custom_call.1} parent=1 // pred_check
      _
    $region15: #{tpu_custom_call.1} parent=1 // pred_check_branch
      %20 = sbr.rel (0) target = $region17
    $region16: #{tpu_custom_call.1} parent=1 // pred_region
      _
    $region17: #{tpu_custom_call.1} parent=1 // pred_fallthru
      _
    // Predicated region
    $region18: #{tpu_custom_call.1} parent=1 // pred_check
      _
    $region19: #{tpu_custom_call.1} parent=1 // pred_check_branch
      %22 = sbr.rel (0) target = $region21
    $region20: #{tpu_custom_call.1} parent=1 // pred_region
      _
    $region21: #{tpu_custom_call.1} parent=1 // pred_fallthru
      _
    // Predicated region
    $region22: #{tpu_custom_call.1} parent=1 // pred_check
      _
    $region23: #{tpu_custom_call.1} parent=1 // pred_check_branch
      %24 = sbr.rel (0) target = $region25
    $region24: #{tpu_custom_call.1} parent=1 // pred_region
      _
    $region25: #{tpu_custom_call.1} parent=1 // pred_fallthru
      _
    // Predicated region
    $region26: #{tpu_custom_call.1} parent=1 // pred_check
      _
    $region27: #{tpu_custom_call.1} parent=1 // pred_check_branch
      %26 = sbr.rel (0) target = $region29
    $region28: #{tpu_custom_call.1} parent=1 // pred_region
      _
    $region29: #{tpu_custom_call.1} parent=1 // pred_fallthru
      _
    %v27 = vld [vmem:[%s0] sm:$0xff]
    %v28 = vld [vmem:[%s0 + $0x8] sm:$0x3]
    %v29 = vld [vmem:[%s0 + $0xa] sm:$0xff]
    %v30 = vld [vmem:[%s0 + $0x12] sm:$0x3]
    %v31 = vld [vmem:[%s0 + $0x14] sm:$0xff]
    %v32 = vld [vmem:[%s0 + $0x1c] sm:$0x3]
    %v33 = vld [vmem:[%s0 + $0x1e] sm:$0xff]
    %v34 = vld [vmem:[%s0 + $0x26] sm:$0x3]
    %v35 = vld [vmem:[%s1] sm:$0xff]
    %v36 = vld [vmem:[%s1 + $0x8] sm:$0xff]
    %v37 = vld [vmem:[%s1 + $0x10] sm:$0xff]
    %v38 = vld [vmem:[%s1 + $0x18] sm:$0xff]
    %v39 = vld [vmem:[%s1 + $0x20] sm:$0xff]
    %v40 = vld [vmem:[%s1 + $0x28] sm:$0xff]
    %v41 = vld [vmem:[%s1 + $0x30] sm:$0xff]
    %v42 = vld [vmem:[%s1 + $0x38] sm:$0xff]
    %v43 = vld [vmem:[%s1 + $0x40] sm:$0xff]
    %v44 = vld [vmem:[%s1 + $0x48] sm:$0xff]
    %v45 = vld [vmem:[%s1 + $0x50] sm:$0xff]
    %v46 = vld [vmem:[%s1 + $0x58] sm:$0xff]
    %v47 = vld [vmem:[%s1 + $0x60] sm:$0xff]
    %v48 = vld [vmem:[%s1 + $0x68] sm:$0xff]
    %v49 = vld [vmem:[%s1 + $0x70] sm:$0xff]
    %v50 = vld [vmem:[%s1 + $0x78] sm:$0xff]
    %v51 = vld [vmem:[%s1 + $0x80] sm:$0xff]
    %v52 = vld [vmem:[%s1 + $0x88] sm:$0xff]
    %v53 = vld [vmem:[%s1 + $0x90] sm:$0xff]
    %v54 = vld [vmem:[%s1 + $0x98] sm:$0xff]
    %v55 = vld [vmem:[%s1 + $0xa0] sm:$0xff]
    %v56 = vld [vmem:[%s1 + $0xa8] sm:$0xff]
    %v57 = vld [vmem:[%s1 + $0xb0] sm:$0xff]
    %v58 = vld [vmem:[%s1 + $0xb8] sm:$0xff]
    %v59 = vld [vmem:[%s1 + $0xc0] sm:$0xff]
    %v60 = vld [vmem:[%s1 + $0xc8] sm:$0xff]
    %v61 = vld [vmem:[%s1 + $0xd0] sm:$0xff]
    %v62 = vld [vmem:[%s1 + $0xd8] sm:$0xff]
    %v63 = vld [vmem:[%s1 + $0xe0] sm:$0xff]
    %v64 = vld [vmem:[%s1 + $0xe8] sm:$0xff]
    %v65 = vld [vmem:[%s1 + $0xf0] sm:$0xff]
    %v66 = vld [vmem:[%s1 + $0xf8] sm:$0xff]
    %v67 = vld [vmem:[%s1 + $0x100] sm:$0xff]
    %v68 = vld [vmem:[%s1 + $0x108] sm:$0xff]
    %v69 = vld [vmem:[%s1 + $0x110] sm:$0xff]
    %v70 = vld [vmem:[%s1 + $0x118] sm:$0xff]
    %v71 = vld [vmem:[%s1 + $0x120] sm:$0xff]
    %v72 = vld [vmem:[%s1 + $0x128] sm:$0xff]
    %v73 = vld [vmem:[%s1 + $0x130] sm:$0xff]
    %v74 = vld [vmem:[%s1 + $0x138] sm:$0xff]
    %v75 = vld [vmem:[%s1 + $0x140] sm:$0xff]
    %v76 = vld [vmem:[%s1 + $0x148] sm:$0xff]
    %v77 = vld [vmem:[%s1 + $0x150] sm:$0xff]
    %v78 = vld [vmem:[%s1 + $0x158] sm:$0xff]
    %v79 = vld [vmem:[%s1 + $0x160] sm:$0xff]
    %v80 = vld [vmem:[%s1 + $0x168] sm:$0xff]
    %v81 = vld [vmem:[%s1 + $0x170] sm:$0xff]
    %v82 = vld [vmem:[%s1 + $0x178] sm:$0xff]
    %v83 = vld [vmem:[%s1 + $0x180] sm:$0xff]
    %v84 = vld [vmem:[%s1 + $0x188] sm:$0xff]
    %v85 = vld [vmem:[%s1 + $0x190] sm:$0xff]
    %v86 = vld [vmem:[%s1 + $0x198] sm:$0xff]
    %v87 = vld [vmem:[%s1 + $0x1a0] sm:$0xff]
    %v88 = vld [vmem:[%s1 + $0x1a8] sm:$0xff]
    %v89 = vld [vmem:[%s1 + $0x1b0] sm:$0xff]
    %v90 = vld [vmem:[%s1 + $0x1b8] sm:$0xff]
    %v91 = vld [vmem:[%s1 + $0x1c0] sm:$0xff]
    %v92 = vld [vmem:[%s1 + $0x1c8] sm:$0xff]
    %v93 = vld [vmem:[%s1 + $0x1d0] sm:$0xff]
    %v94 = vld [vmem:[%s1 + $0x1d8] sm:$0xff]
    %v95 = vld [vmem:[%s1 + $0x1e0] sm:$0xff]
    %v96 = vld [vmem:[%s1 + $0x1e8] sm:$0xff]
    %v97 = vld [vmem:[%s1 + $0x1f0] sm:$0xff]
    %v98 = vld [vmem:[%s1 + $0x1f8] sm:$0xff]
    %v99 = vld [vmem:[%s1 + $0x200] sm:$0xff]
    %v100 = vld [vmem:[%s1 + $0x208] sm:$0xff]
    %v101 = vld [vmem:[%s1 + $0x210] sm:$0xff]
    %v102 = vld [vmem:[%s1 + $0x218] sm:$0xff]
    %v103 = vld [vmem:[%s1 + $0x220] sm:$0xff]
    %v104 = vld [vmem:[%s1 + $0x228] sm:$0xff]
    %v105 = vld [vmem:[%s1 + $0x230] sm:$0xff]
    %v106 = vld [vmem:[%s1 + $0x238] sm:$0xff]
    %v107 = vld [vmem:[%s1 + $0x240] sm:$0xff]
    %v108 = vld [vmem:[%s1 + $0x248] sm:$0xff]
    %v109 = vld [vmem:[%s1 + $0x250] sm:$0xff]
    %v110 = vld [vmem:[%s1 + $0x258] sm:$0xff]
    %v111 = vld [vmem:[%s1 + $0x260] sm:$0xff]
    %v112 = vld [vmem:[%s1 + $0x268] sm:$0xff]
    %v113 = vld [vmem:[%s1 + $0x270] sm:$0xff]
    %v114 = vld [vmem:[%s1 + $0x278] sm:$0xff]
    %v115 = vld [vmem:[%s1 + $0x280] sm:$0xff]
    %v116 = vld [vmem:[%s1 + $0x288] sm:$0xff]
    %v117 = vld [vmem:[%s1 + $0x290] sm:$0xff]
    %v118 = vld [vmem:[%s1 + $0x298] sm:$0xff]
    %v119 = vld [vmem:[%s1 + $0x2a0] sm:$0xff]
    %v120 = vld [vmem:[%s1 + $0x2a8] sm:$0xff]
    %v121 = vld [vmem:[%s1 + $0x2b0] sm:$0xff]
    %v122 = vld [vmem:[%s1 + $0x2b8] sm:$0xff]
    %v123 = vld [vmem:[%s1 + $0x2c0] sm:$0xff]
    %v124 = vld [vmem:[%s1 + $0x2c8] sm:$0xff]
    %v125 = vld [vmem:[%s1 + $0x2d0] sm:$0xff]
    %v126 = vld [vmem:[%s1 + $0x2d8] sm:$0xff]
    %v127 = vld [vmem:[%s1 + $0x2e0] sm:$0xff]
    %v128 = vld [vmem:[%s1 + $0x2e8] sm:$0xff]
    %v129 = vld [vmem:[%s1 + $0x2f0] sm:$0xff]
    %v130 = vld [vmem:[%s1 + $0x2f8] sm:$0xff]
    %v131 = vld [vmem:[%s1 + $0x300] sm:$0xff]
    %v132 = vld [vmem:[%s1 + $0x308] sm:$0xff]
    %v133 = vld [vmem:[%s1 + $0x310] sm:$0xff]
    %v134 = vld [vmem:[%s1 + $0x318] sm:$0xff]
    %v135 = vld [vmem:[%s1 + $0x320] sm:$0xff]
    %v136 = vld [vmem:[%s1 + $0x328] sm:$0xff]
    %v137 = vld [vmem:[%s1 + $0x330] sm:$0xff]
    %v138 = vld [vmem:[%s1 + $0x338] sm:$0xff]
    %v139 = vld [vmem:[%s1 + $0x340] sm:$0xff]
    %v140 = vld [vmem:[%s1 + $0x348] sm:$0xff]
    %v141 = vld [vmem:[%s1 + $0x350] sm:$0xff]
    %v142 = vld [vmem:[%s1 + $0x358] sm:$0xff]
    %v143 = vld [vmem:[%s1 + $0x360] sm:$0xff]
    %v144 = vld [vmem:[%s1 + $0x368] sm:$0xff]
    %v145 = vld [vmem:[%s1 + $0x370] sm:$0xff]
    %v146 = vld [vmem:[%s1 + $0x378] sm:$0xff]
    %v147 = vld [vmem:[%s1 + $0x380] sm:$0xff]
    %v148 = vld [vmem:[%s1 + $0x388] sm:$0xff]
    %v149 = vld [vmem:[%s1 + $0x390] sm:$0xff]
    %v150 = vld [vmem:[%s1 + $0x398] sm:$0xff]
    %v151 = vld [vmem:[%s1 + $0x3a0] sm:$0xff]
    %v152 = vld [vmem:[%s1 + $0x3a8] sm:$0xff]
    %v153 = vld [vmem:[%s1 + $0x3b0] sm:$0xff]
    %v154 = vld [vmem:[%s1 + $0x3b8] sm:$0xff]
    %v155 = vld [vmem:[%s1 + $0x3c0] sm:$0xff]
    %v156 = vld [vmem:[%s1 + $0x3c8] sm:$0xff]
    %v157 = vld [vmem:[%s1 + $0x3d0] sm:$0xff]
    %v158 = vld [vmem:[%s1 + $0x3d8] sm:$0xff]
    %v159 = vld [vmem:[%s1 + $0x3e0] sm:$0xff]
    %v160 = vld [vmem:[%s1 + $0x3e8] sm:$0xff]
    %v161 = vld [vmem:[%s1 + $0x3f0] sm:$0xff]
    %v162 = vld [vmem:[%s1 + $0x3f8] sm:$0xff]
    %v163 = vld [vmem:[%s1 + $0x400] sm:$0xff]
    %v164 = vld [vmem:[%s1 + $0x408] sm:$0xff]
    %v165 = vld [vmem:[%s1 + $0x410] sm:$0xff]
    %v166 = vld [vmem:[%s1 + $0x418] sm:$0xff]
    %v167 = vld [vmem:[%s1 + $0x420] sm:$0xff]
    %v168 = vld [vmem:[%s1 + $0x428] sm:$0xff]
    %v169 = vld [vmem:[%s1 + $0x430] sm:$0xff]
    %v170 = vld [vmem:[%s1 + $0x438] sm:$0xff]
    %v171 = vld [vmem:[%s1 + $0x440] sm:$0xff]
    %v172 = vld [vmem:[%s1 + $0x448] sm:$0xff]
    %v173 = vld [vmem:[%s1 + $0x450] sm:$0xff]
    %v174 = vld [vmem:[%s1 + $0x458] sm:$0xff]
    %v175 = vld [vmem:[%s1 + $0x460] sm:$0xff]
    %v176 = vld [vmem:[%s1 + $0x468] sm:$0xff]
    %v177 = vld [vmem:[%s1 + $0x470] sm:$0xff]
    %v178 = vld [vmem:[%s1 + $0x478] sm:$0xff]
    %v179 = vld [vmem:[%s2] sm:$0x3]
    %v181 = vperm.slane %v179, 0
    %v182 = vperm.slane %v179, 1
    %193 = vst [vmem:[#allocation1] ss:$4 sm:$0xff] %v27
    %s194 = scalar_lea.vmem [#allocation1], 1
    %195 = vst [vmem:[%s194] ss:$4 sm:$0xff] %v29
    %s196 = scalar_lea.vmem [#allocation1], 2
    %197 = vst [vmem:[%s196] ss:$4 sm:$0xff] %v31
    %s198 = scalar_lea.vmem [#allocation1], 3
    %199 = vst [vmem:[%s198] ss:$4 sm:$0xff] %v33
    %s200 = scalar_lea.vmem [#allocation1], 32
    %201 = vst [vmem:[%s200] ss:$4 sm:$0xff] %v28
    %s202 = scalar_lea.vmem [#allocation1], 33
    %203 = vst [vmem:[%s202] ss:$4 sm:$0xff] %v30
    %s204 = scalar_lea.vmem [#allocation1], 34
    %205 = vst [vmem:[%s204] ss:$4 sm:$0xff] %v32
    %s206 = scalar_lea.vmem [#allocation1], 35
    %207 = vst [vmem:[%s206] ss:$4 sm:$0xff] %v34
    %v208 = vld.sshfl [vmem:[#allocation1] sm:$0xff pattern:$0x73625140]
    %v209 = vld.sshfl [vmem:[#allocation1 + $0x8] sm:$0xff pattern:$0x73625140]
    %v210 = vld.sshfl [vmem:[#allocation1 + $0x10] sm:$0xff pattern:$0x73625140]
    %v211 = vld.sshfl [vmem:[#allocation1 + $0x18] sm:$0xff pattern:$0x73625140]
    %v212 = vld.sshfl [vmem:[#allocation1 + $0x20] sm:$0xff pattern:$0x73625140]
    %vm217 = vcmask 523264
    %v218 = vsel %vm217, %v212, 0
    %220 = vmatpush.msra.mxu0 %v65
    %221 = vmatpush.msra.mxu0 %v63
    %222 = vmatpush.msra.mxu0 %v61
    %223 = vmatpush.msra.mxu0 %v59
    %224 = vmatpush.msra.mxu0 %v57
    %225 = vmatpush.msra.mxu0 %v55
    %226 = vmatpush.msra.mxu0 %v53
    %227 = vmatpush.msra.mxu0 %v51
    %228 = vmatpush.msra.mxu0 %v49
    %229 = vmatpush.msra.mxu0 %v47
    %230 = vmatpush.msra.mxu0 %v45
    %231 = vmatpush.msra.mxu0 %v43
    %232 = vmatpush.msra.mxu0 %v41
    %233 = vmatpush.msra.mxu0 %v39
    %234 = vmatpush.msra.mxu0 %v37
    %235 = vmatpush.msra.mxu0 %v35
    %236 = vmatmul.f32.gmra.mxu0 %v208
    %v237 = vpop.f32.mrf.mxu0
    %v238 = vadd.f32 %v181, %v237
    %239 = vdwg.mxu0
    %240 = vmatpush.msra.mxu0 %v97
    %241 = vmatpush.msra.mxu0 %v95
    %242 = vmatpush.msra.mxu0 %v93
    %243 = vmatpush.msra.mxu0 %v91
    %244 = vmatpush.msra.mxu0 %v89
    %245 = vmatpush.msra.mxu0 %v87
    %246 = vmatpush.msra.mxu0 %v85
    %247 = vmatpush.msra.mxu0 %v83
    %248 = vmatpush.msra.mxu0 %v81
    %249 = vmatpush.msra.mxu0 %v79
    %250 = vmatpush.msra.mxu0 %v77
    %251 = vmatpush.msra.mxu0 %v75
    %252 = vmatpush.msra.mxu0 %v73
    %253 = vmatpush.msra.mxu0 %v71
    %254 = vmatpush.msra.mxu0 %v69
    %255 = vmatpush.msra.mxu0 %v67
    %256 = vmatmul.f32.gmra.mxu0 %v209
    %v257 = vpop.f32.mrf.mxu0
    %v258 = vadd.f32 %v238, %v257
    %259 = vdwg.mxu0
    %260 = vmatpush.msra.mxu0 %v129
    %261 = vmatpush.msra.mxu0 %v127
    %262 = vmatpush.msra.mxu0 %v125
    %263 = vmatpush.msra.mxu0 %v123
    %264 = vmatpush.msra.mxu0 %v121
    %265 = vmatpush.msra.mxu0 %v119
    %266 = vmatpush.msra.mxu0 %v117
    %267 = vmatpush.msra.mxu0 %v115
    %268 = vmatpush.msra.mxu0 %v113
    %269 = vmatpush.msra.mxu0 %v111
    %270 = vmatpush.msra.mxu0 %v109
    %271 = vmatpush.msra.mxu0 %v107
    %272 = vmatpush.msra.mxu0 %v105
    %273 = vmatpush.msra.mxu0 %v103
    %274 = vmatpush.msra.mxu0 %v101
    %275 = vmatpush.msra.mxu0 %v99
    %276 = vmatmul.f32.gmra.mxu0 %v210
    %v277 = vpop.f32.mrf.mxu0
    %v278 = vadd.f32 %v258, %v277
    %279 = vdwg.mxu0
    %280 = vmatpush.msra.mxu0 %v161
    %281 = vmatpush.msra.mxu0 %v159
    %282 = vmatpush.msra.mxu0 %v157
    %283 = vmatpush.msra.mxu0 %v155
    %284 = vmatpush.msra.mxu0 %v153
    %285 = vmatpush.msra.mxu0 %v151
    %286 = vmatpush.msra.mxu0 %v149
    %287 = vmatpush.msra.mxu0 %v147
    %288 = vmatpush.msra.mxu0 %v145
    %289 = vmatpush.msra.mxu0 %v143
    %290 = vmatpush.msra.mxu0 %v141
    %291 = vmatpush.msra.mxu0 %v139
    %292 = vmatpush.msra.mxu0 %v137
    %293 = vmatpush.msra.mxu0 %v135
    %294 = vmatpush.msra.mxu0 %v133
    %295 = vmatpush.msra.mxu0 %v131
    %296 = vmatmul.f32.gmra.mxu0 %v211
    %v297 = vpop.f32.mrf.mxu0
    %v298 = vadd.f32 %v278, %v297
    %299 = vdwg.mxu0
    %300 = vmatpush.msra.mxu0 0.0
    %301 = vmatpush.msra.mxu0 0.0
    %302 = vmatpush.msra.mxu0 0.0
    %303 = vmatpush.msra.mxu0 0.0
    %304 = vmatpush.msra.mxu0 0.0
    %305 = vmatpush.msra.mxu0 0.0
    %306 = vmatpush.msra.mxu0 0.0
    %307 = vmatpush.msra.mxu0 0.0
    %308 = vmatpush.msra.mxu0 %v177
    %309 = vmatpush.msra.mxu0 %v175
    %310 = vmatpush.msra.mxu0 %v173
    %311 = vmatpush.msra.mxu0 %v171
    %312 = vmatpush.msra.mxu0 %v169
    %313 = vmatpush.msra.mxu0 %v167
    %314 = vmatpush.msra.mxu0 %v165
    %315 = vmatpush.msra.mxu0 %v163
    %316 = vmatmul.f32.gmra.mxu0 %v218
    %v317 = vpop.f32.mrf.mxu0
    %v318 = vadd.f32 %v298, %v317
    %319 = vdwg.mxu0
    %320 = vmatpush.msra.mxu0 %v66
    %321 = vmatpush.msra.mxu0 %v64
    %322 = vmatpush.msra.mxu0 %v62
    %323 = vmatpush.msra.mxu0 %v60
    %324 = vmatpush.msra.mxu0 %v58
    %325 = vmatpush.msra.mxu0 %v56
    %326 = vmatpush.msra.mxu0 %v54
    %327 = vmatpush.msra.mxu0 %v52
    %328 = vmatpush.msra.mxu0 %v50
    %329 = vmatpush.msra.mxu0 %v48
    %330 = vmatpush.msra.mxu0 %v46
    %331 = vmatpush.msra.mxu0 %v44
    %332 = vmatpush.msra.mxu0 %v42
    %333 = vmatpush.msra.mxu0 %v40
    %334 = vmatpush.msra.mxu0 %v38
    %335 = vmatpush.msra.mxu0 %v36
    %336 = vmatmul.f32.gmra.mxu0 %v208
    %v337 = vpop.f32.mrf.mxu0
    %v338 = vadd.f32 %v182, %v337
    %339 = vdwg.mxu0
    %340 = vmatpush.msra.mxu0 %v98
    %341 = vmatpush.msra.mxu0 %v96
    %342 = vmatpush.msra.mxu0 %v94
    %343 = vmatpush.msra.mxu0 %v92
    %344 = vmatpush.msra.mxu0 %v90
    %345 = vmatpush.msra.mxu0 %v88
    %346 = vmatpush.msra.mxu0 %v86
    %347 = vmatpush.msra.mxu0 %v84
    %348 = vmatpush.msra.mxu0 %v82
    %349 = vmatpush.msra.mxu0 %v80
    %350 = vmatpush.msra.mxu0 %v78
    %351 = vmatpush.msra.mxu0 %v76
    %352 = vmatpush.msra.mxu0 %v74
    %353 = vmatpush.msra.mxu0 %v72
    %354 = vmatpush.msra.mxu0 %v70
    %355 = vmatpush.msra.mxu0 %v68
    %356 = vmatmul.f32.gmra.mxu0 %v209
    %v357 = vpop.f32.mrf.mxu0
    %v358 = vadd.f32 %v338, %v357
    %359 = vdwg.mxu0
    %360 = vmatpush.msra.mxu0 %v130
    %361 = vmatpush.msra.mxu0 %v128
    %362 = vmatpush.msra.mxu0 %v126
    %363 = vmatpush.msra.mxu0 %v124
    %364 = vmatpush.msra.mxu0 %v122
    %365 = vmatpush.msra.mxu0 %v120
    %366 = vmatpush.msra.mxu0 %v118
    %367 = vmatpush.msra.mxu0 %v116
    %368 = vmatpush.msra.mxu0 %v114
    %369 = vmatpush.msra.mxu0 %v112
    %370 = vmatpush.msra.mxu0 %v110
    %371 = vmatpush.msra.mxu0 %v108
    %372 = vmatpush.msra.mxu0 %v106
    %373 = vmatpush.msra.mxu0 %v104
    %374 = vmatpush.msra.mxu0 %v102
    %375 = vmatpush.msra.mxu0 %v100
    %376 = vmatmul.f32.gmra.mxu0 %v210
    %v377 = vpop.f32.mrf.mxu0
    %v378 = vadd.f32 %v358, %v377
    %379 = vdwg.mxu0
    %380 = vmatpush.msra.mxu0 %v162
    %381 = vmatpush.msra.mxu0 %v160
    %382 = vmatpush.msra.mxu0 %v158
    %383 = vmatpush.msra.mxu0 %v156
    %384 = vmatpush.msra.mxu0 %v154
    %385 = vmatpush.msra.mxu0 %v152
    %386 = vmatpush.msra.mxu0 %v150
    %387 = vmatpush.msra.mxu0 %v148
    %388 = vmatpush.msra.mxu0 %v146
    %389 = vmatpush.msra.mxu0 %v144
    %390 = vmatpush.msra.mxu0 %v142
    %391 = vmatpush.msra.mxu0 %v140
    %392 = vmatpush.msra.mxu0 %v138
    %393 = vmatpush.msra.mxu0 %v136
    %394 = vmatpush.msra.mxu0 %v134
    %395 = vmatpush.msra.mxu0 %v132
    %396 = vmatmul.f32.gmra.mxu0 %v211
    %v397 = vpop.f32.mrf.mxu0
    %v398 = vadd.f32 %v378, %v397
    %399 = vdwg.mxu0
    %400 = vmatpush.msra.mxu0 0.0
    %401 = vmatpush.msra.mxu0 0.0
    %402 = vmatpush.msra.mxu0 0.0
    %403 = vmatpush.msra.mxu0 0.0
    %404 = vmatpush.msra.mxu0 0.0
    %405 = vmatpush.msra.mxu0 0.0
    %406 = vmatpush.msra.mxu0 0.0
    %407 = vmatpush.msra.mxu0 0.0
    %408 = vmatpush.msra.mxu0 %v178
    %409 = vmatpush.msra.mxu0 %v176
    %410 = vmatpush.msra.mxu0 %v174
    %411 = vmatpush.msra.mxu0 %v172
    %412 = vmatpush.msra.mxu0 %v170
    %413 = vmatpush.msra.mxu0 %v168
    %414 = vmatpush.msra.mxu0 %v166
    %415 = vmatpush.msra.mxu0 %v164
    %416 = vmatmul.f32.gmra.mxu0 %v218
    %v417 = vpop.f32.mrf.mxu0
    %v418 = vadd.f32 %v398, %v417
    %419 = vdwg.mxu0
    %v420 = vmax.f32 %v318, 0.0
    %v421 = vmax.f32 %v418, 0.0
    %v422 = vld [vmem:[%s3] sm:$0xff]
    %v423 = vld [vmem:[%s3 + $0x8] sm:$0xff]
    %v424 = vld [vmem:[%s3 + $0x10] sm:$0xff]
    %v425 = vld [vmem:[%s3 + $0x18] sm:$0xff]
    %v426 = vld [vmem:[%s3 + $0x20] sm:$0xff]
    %v427 = vld [vmem:[%s3 + $0x28] sm:$0xff]
    %v428 = vld [vmem:[%s3 + $0x30] sm:$0xff]
    %v429 = vld [vmem:[%s3 + $0x38] sm:$0xff]
    %v430 = vld [vmem:[%s3 + $0x40] sm:$0xff]
    %v431 = vld [vmem:[%s3 + $0x48] sm:$0xff]
    %v432 = vld [vmem:[%s3 + $0x50] sm:$0xff]
    %v433 = vld [vmem:[%s3 + $0x58] sm:$0xff]
    %v434 = vld [vmem:[%s3 + $0x60] sm:$0xff]
    %v435 = vld [vmem:[%s3 + $0x68] sm:$0xff]
    %v436 = vld [vmem:[%s3 + $0x70] sm:$0xff]
    %v437 = vld [vmem:[%s3 + $0x78] sm:$0xff]
    %v438 = vld [vmem:[%s3 + $0x80] sm:$0xff]
    %v439 = vld [vmem:[%s3 + $0x88] sm:$0xff]
    %v440 = vld [vmem:[%s3 + $0x90] sm:$0x3f]
    %v441 = vld [vmem:[%s4] sm:$0x1]
    %v443 = vperm.slane %v441, 0
    %vm445 = vcmask 179200
    %v447 = vsel %vm445, %v421, 0
    %vm449 = vcmask 1045504
    %v451 = vsel %vm449, %v440, 0
    %453 = vmatpush.msra.mxu0 %v437
    %454 = vmatpush.msra.mxu0 %v436
    %455 = vmatpush.msra.mxu0 %v435
    %456 = vmatpush.msra.mxu0 %v434
    %457 = vmatpush.msra.mxu0 %v433
    %458 = vmatpush.msra.mxu0 %v432
    %459 = vmatpush.msra.mxu0 %v431
    %460 = vmatpush.msra.mxu0 %v430
    %461 = vmatpush.msra.mxu0 %v429
    %462 = vmatpush.msra.mxu0 %v428
    %463 = vmatpush.msra.mxu0 %v427
    %464 = vmatpush.msra.mxu0 %v426
    %465 = vmatpush.msra.mxu0 %v425
    %466 = vmatpush.msra.mxu0 %v424
    %467 = vmatpush.msra.mxu0 %v423
    %468 = vmatpush.msra.mxu0 %v422
    %469 = vmatmul.f32.gmra.mxu0 %v420
    %v470 = vpop.f32.mrf.mxu0
    %v471 = vadd.f32 %v443, %v470
    %472 = vdwg.mxu0
    %473 = vmatpush.msra.mxu0 0.0
    %474 = vmatpush.msra.mxu0 0.0
    %475 = vmatpush.msra.mxu0 0.0
    %476 = vmatpush.msra.mxu0 0.0
    %477 = vmatpush.msra.mxu0 0.0
    %478 = vmatpush.msra.mxu0 0.0
    %479 = vmatpush.msra.mxu0 0.0
    %480 = vmatpush.msra.mxu0 0.0
    %481 = vmatpush.msra.mxu0 0.0
    %482 = vmatpush.msra.mxu0 0.0
    %483 = vmatpush.msra.mxu0 0.0
    %484 = vmatpush.msra.mxu0 0.0
    %485 = vmatpush.msra.mxu0 0.0
    %486 = vmatpush.msra.mxu0 %v451
    %487 = vmatpush.msra.mxu0 %v439
    %488 = vmatpush.msra.mxu0 %v438
    %489 = vmatmul.f32.gmra.mxu0 %v447
    %v490 = vpop.f32.mrf.mxu0
    %v491 = vadd.f32 %v471, %v490
    %492 = vdwg.mxu0
    %v493 = vmax.f32 %v491, 0.0
    %v494 = vld [vmem:[%s5] sm:$0xff]
    %v495 = vld [vmem:[%s5 + $0x8] sm:$0xff]
    %v496 = vld [vmem:[%s5 + $0x10] sm:$0xff]
    %v497 = vld [vmem:[%s5 + $0x18] sm:$0xff]
    %v498 = vld [vmem:[%s5 + $0x20] sm:$0xff]
    %v499 = vld [vmem:[%s5 + $0x28] sm:$0xff]
    %v500 = vld [vmem:[%s5 + $0x30] sm:$0x3]
    %v501 = vld [vmem:[%s6] sm:$0x1]
    %v503 = vperm.slane %v501, 0
    %vm505 = vcmask 408576
    %v507 = vsel %vm505, %v493, 0
    %vm509 = vcmask 1041408
    %v511 = vsel %vm509, %v500, 0
    %513 = vmatpush.msra.mxu0 0.0
    %514 = vmatpush.msra.mxu0 0.0
    %515 = vmatpush.msra.mxu0 0.0
    %516 = vmatpush.msra.mxu0 0.0
    %517 = vmatpush.msra.mxu0 0.0
    %518 = vmatpush.msra.mxu0 0.0
    %519 = vmatpush.msra.mxu0 0.0
    %520 = vmatpush.msra.mxu0 0.0
    %521 = vmatpush.msra.mxu0 0.0
    %522 = vmatpush.msra.mxu0 %v511
    %523 = vmatpush.msra.mxu0 %v499
    %524 = vmatpush.msra.mxu0 %v498
    %525 = vmatpush.msra.mxu0 %v497
    %526 = vmatpush.msra.mxu0 %v496
    %527 = vmatpush.msra.mxu0 %v495
    %528 = vmatpush.msra.mxu0 %v494
    %529 = vmatmul.f32.gmra.mxu0 %v507
    %v530 = vpop.f32.mrf.mxu0
    %v531 = vadd.f32 %v503, %v530
    %532 = vdwg.mxu0
    %vm533 = vcmask 15360
    %534 = vst.msk [vmem:[#allocation2] sm:$0xff] %vm533, %v531
    // Predicated region
    $region30: #{tpu_custom_call.1} parent=1 // pred_check
      _
    $region31: #{tpu_custom_call.1} parent=1 // pred_check_branch
      %536 = sbr.rel (0) target = $region33
    $region32: #{tpu_custom_call.1} parent=1 // pred_region
      %538 = vsyncadd [#allocation3], 96
      %s539 = sshll.u32 [#allocation2], 4
      %s540 = int_to_ptr.vmem [resolvable:$true] %s539
      %s541 = sshll.u32 %s7, 4
      %s542 = int_to_ptr.hbm [resolvable:$true] %s541
      %547 = dma.vmem_to_hbm [thread:$0]  %s540, 32, %s542, [#allocation3], 32, 32, 2
    $region33: #{tpu_custom_call.1} parent=1 // pred_fallthru
      _
    // Predicated region
    $region34: #{tpu_custom_call.1} parent=1 // pred_check
      _
    $region35: #{tpu_custom_call.1} parent=1 // pred_check_branch
      %549 = sbr.rel (0) target = $region37
    $region36: #{tpu_custom_call.1} parent=1 // pred_region
      %551 = dma.done [#allocation3], 128
    $region37: #{tpu_custom_call.1} parent=1 // pred_fallthru
      _
    %552 = vsyncpa [#allocation3], 1

</llo_original>
